<compile_context>
chip_gen: v5e
topology: v5e:2x2
jax: 0.10.0
libtpu: 0.0.40
codegen_flags: <defaults>
</compile_context>

<pallas_src>
import functools

import jax
import jax.numpy as jnp
from jax.experimental import pallas as pl
from jax.experimental.pallas import tpu as pltpu


def _round_up(x, m):
    return ((x + m - 1) // m) * m


def _mlp_kernel(xt_ref, slab_ref, o_ref, *, n_steps, H, K):
    B = xt_ref.shape[0]

    # Recover t from lane 2 of the merged input; clamp so out-of-range t
    # behaves like the clamping reference (cheap VPU op on (B,1)).
    ti = jnp.clip(xt_ref[:, 2:3].astype(jnp.int32), 0, n_steps - 1)      # (B,1)
    steps = jax.lax.broadcasted_iota(jnp.int32, (B, n_steps), 1)
    onehot = (steps == ti).astype(jnp.float32)                           # (B,n_steps)

    # Augmented operand [ one_hot(t) | x0 x1 t 0... ]  -> (B, K).
    # The slab row multiplied by the t-carrying lane is all zeros, so it
    # contributes nothing; no need to mask it out.
    aug = jnp.concatenate([onehot, xt_ref[...]], axis=1)                 # (B, K)

    # Single MXU matmul gives, per H-wide lane block:
    #   [:, 0:H]   = x @ W1 + b1 + emb1[t]
    #   [:, H:2H]  =            b2 + emb2[t]
    #   [:, 2H:3H] =            b3 + emb3[t]
    eh = jnp.dot(aug, slab_ref[0:K, :], preferred_element_type=jnp.float32)

    # Block 1: Linear(2->H) already folded in; just ReLU.
    h = jnp.maximum(eh[:, 0:H], 0.0)

    # Block 2: Linear(H->H) + emb + ReLU (tile-aligned static slab slice).
    h = jnp.dot(h, slab_ref[K:K + H, 0:H],
                preferred_element_type=jnp.float32) + eh[:, H:2 * H]
    h = jnp.maximum(h, 0.0)

    # Block 3: Linear(H->H) + emb + ReLU.
    h = jnp.dot(h, slab_ref[K:K + H, H:2 * H],
                preferred_element_type=jnp.float32) + eh[:, 2 * H:3 * H]
    h = jnp.maximum(h, 0.0)

    # Output head: Linear(H->2); weight + bias come from the same slab.
    out = jnp.dot(h, slab_ref[K:K + H, 2 * H:2 * H + 2],
                  preferred_element_type=jnp.float32)
    out = out + slab_ref[K + H:K + H + 1, 2 * H:2 * H + 2]
    o_ref[...] = out.astype(o_ref.dtype)


def fuse_params(p):
    """Offline fusion of every parameter into one f32 slab (see header)."""
    n_steps, H = p["emb1"].shape
    K = _round_up(n_steps + 3, 8)                 # aug width: onehot + x0,x1,t + pad
    R = K + H + 1
    slab = jnp.zeros((R, 3 * H), jnp.float32)
    slab = slab.at[0:n_steps, 0:H].set(p["emb1"] + p["b1"])
    slab = slab.at[0:n_steps, H:2 * H].set(p["emb2"] + p["b2"])
    slab = slab.at[0:n_steps, 2 * H:3 * H].set(p["emb3"] + p["b3"])
    slab = slab.at[n_steps:n_steps + 2, 0:H].set(p["w1"])        # W1 folded
    slab = slab.at[K:K + H, 0:H].set(p["w2"])
    slab = slab.at[K:K + H, H:2 * H].set(p["w3"])
    slab = slab.at[K:K + H, 2 * H:2 * H + 2].set(p["w4"])
    slab = slab.at[K + H, 2 * H:2 * H + 2].set(p["b4"][0])
    return dict(slab=slab, n_steps=n_steps, H=H, K=K)


def toy_ddpm_forward(x, t, fused):
    """x: (B, 2) float32, t: (B,) int, fused: output of fuse_params()."""
    B = x.shape[0]
    n_steps, H, K = fused["n_steps"], fused["H"], fused["K"]
    xw = K - n_steps                              # width of merged x/t input (>= 3)
    xt = jnp.zeros((B, xw), jnp.float32)
    xt = xt.at[:, 0:2].set(x.astype(jnp.float32))
    xt = xt.at[:, 2].set(t.astype(jnp.float32))   # t exact in f32 for small steps

    vmem = pl.BlockSpec(memory_space=pltpu.MemorySpace.VMEM)
    kernel = functools.partial(_mlp_kernel, n_steps=n_steps, H=H, K=K)
    return pl.pallas_call(
        kernel,
        out_shape=jax.ShapeDtypeStruct((B, 2), jnp.float32),
        in_specs=[vmem, vmem],
        out_specs=vmem,
    )(xt, fused["slab"])


def init_params(key, n_steps, num_units):
    ks = jax.random.split(key, 11)

    def lin(kw, kb, fan_in, fan_out):
        # deterministic, PyTorch-Linear-like scale; stored as (in, out) = W^T
        bound = 1.0 / jnp.sqrt(fan_in)
        w = jax.random.uniform(kw, (fan_in, fan_out), jnp.float32, -bound, bound)
        b = jax.random.uniform(kb, (1, fan_out), jnp.float32, -bound, bound)
        return w, b

    w1, b1 = lin(ks[0], ks[1], 2, num_units)
    w2, b2 = lin(ks[2], ks[3], num_units, num_units)
    w3, b3 = lin(ks[4], ks[5], num_units, num_units)
    w4, b4 = lin(ks[6], ks[7], num_units, 2)
    emb1 = jax.random.normal(ks[8], (n_steps, num_units), jnp.float32)
    emb2 = jax.random.normal(ks[9], (n_steps, num_units), jnp.float32)
    emb3 = jax.random.normal(ks[10], (n_steps, num_units), jnp.float32)
    return dict(w1=w1, b1=b1, w2=w2, b2=b2, w3=w3, b3=b3, w4=w4, b4=b4,
                emb1=emb1, emb2=emb2, emb3=emb3)


def _reference(x, t, p):
    # Pure-JAX reference mirroring the PyTorch forward exactly (unfused params).
    e = [jnp.take(p["emb1"], t, 0), jnp.take(p["emb2"], t, 0), jnp.take(p["emb3"], t, 0)]
    w = [p["w1"], p["w2"], p["w3"]]
    b = [p["b1"], p["b2"], p["b3"]]
    h = x
    for i in range(3):
        h = h @ w[i] + b[i]
        h = h + e[i]
        h = jnp.maximum(h, 0.0)
    return h @ p["w4"] + p["b4"]


if __name__ == "__main__":
    n_steps = 16
    num_units = 128
    batch = 8

    key = jax.random.PRNGKey(0)
    k_p, k_x, k_t = jax.random.split(key, 3)
    params = init_params(k_p, n_steps, num_units)
    fused = fuse_params(params)

    x = jax.random.normal(k_x, (batch, 2), jnp.float32)
    t = jax.random.randint(k_t, (batch,), 0, n_steps, jnp.int32)

    out = toy_ddpm_forward(x, t, fused)
    out = jax.block_until_ready(out)

    ref = _reference(x, t, params)
    assert out.shape == (batch, 2)
    assert jnp.allclose(out, ref, atol=1e-4, rtol=1e-5)
    print("KERNEL_OK")
</pallas_src>

<mosaic_0001>
module attributes {stable_mosaic.version = 11 : i64} {
  func.func @_mlp_kernel(%arg0: memref<8x8xf32, #tpu.memory_space<vmem>>, %arg1: memref<153x384xf32, #tpu.memory_space<vmem>>, %arg2: memref<8x2xf32, #tpu.memory_space<vmem>>) attributes {dimension_semantics = [], scalar_prefetch = 0 : i64, scratch_operands = 0 : i64, tpu.core_type = #tpu.core_type<tc>} {
    %c0 = arith.constant 0 : index
    %c2 = arith.constant 2 : index
    %0 = vector.load %arg0[%c0, %c2] : memref<8x8xf32, #tpu.memory_space<vmem>>, vector<8x1xf32>
    %1 = arith.fptosi %0 : vector<8x1xf32> to vector<8x1xi32>
    %c0_i32 = arith.constant 0 : i32
    %c15_i32 = arith.constant 15 : i32
    %2 = vector.broadcast %c0_i32 : i32 to vector<8x1xi32>
    %3 = arith.maxsi %2, %1 : vector<8x1xi32>
    %4 = vector.broadcast %c15_i32 : i32 to vector<8x1xi32>
    %5 = arith.minsi %4, %3 : vector<8x1xi32>
    %6 = tpu.iota {dimensions = array<i32: 1>} : vector<8x16xi32>
    %7 = vector.broadcast %5 : vector<8x1xi32> to vector<8x16xi32>
    %8 = arith.cmpi eq, %6, %7 : vector<8x16xi32>
    %9 = arith.extui %8 : vector<8x16xi1> to vector<8x16xi32>
    %10 = arith.sitofp %9 : vector<8x16xi32> to vector<8x16xf32>
    %c0_0 = arith.constant 0 : index
    %c0_1 = arith.constant 0 : index
    %11 = vector.load %arg0[%c0_0, %c0_1] : memref<8x8xf32, #tpu.memory_space<vmem>>, vector<8x8xf32>
    %12 = tpu.concatenate %10, %11 in 1 : vector<8x16xf32>, vector<8x8xf32> -> vector<8x24xf32>
    %c0_2 = arith.constant 0 : index
    %c0_3 = arith.constant 0 : index
    %13 = vector.load %arg1[%c0_2, %c0_3] : memref<153x384xf32, #tpu.memory_space<vmem>>, vector<24x384xf32>
    %cst = arith.constant dense<0.000000e+00> : vector<8x384xf32>
    %14 = tpu.matmul %12, %13, %cst {dimension_numbers = #tpu.dot_dimension_numbers<[1], [0], [0], [1], [0, 0, 1, 1], [], []>} : vector<8x24xf32>, vector<24x384xf32>, vector<8x384xf32> -> vector<8x384xf32>
    %15 = vector.extract_strided_slice %14 {offsets = [0, 0], sizes = [8, 128], strides = [1, 1]} : vector<8x384xf32> to vector<8x128xf32>
    %cst_4 = arith.constant 0.000000e+00 : f32
    %16 = vector.broadcast %cst_4 : f32 to vector<8x128xf32>
    %17 = arith.maximumf %15, %16 : vector<8x128xf32>
    %c24 = arith.constant 24 : index
    %c0_5 = arith.constant 0 : index
    %18 = vector.load %arg1[%c24, %c0_5] : memref<153x384xf32, #tpu.memory_space<vmem>>, vector<128x128xf32>
    %cst_6 = arith.constant dense<0.000000e+00> : vector<8x128xf32>
    %19 = tpu.matmul %17, %18, %cst_6 {dimension_numbers = #tpu.dot_dimension_numbers<[1], [0], [0], [1], [0, 0, 1, 1], [], []>} : vector<8x128xf32>, vector<128x128xf32>, vector<8x128xf32> -> vector<8x128xf32>
    %20 = vector.extract_strided_slice %14 {offsets = [0, 128], sizes = [8, 128], strides = [1, 1]} : vector<8x384xf32> to vector<8x128xf32>
    %21 = arith.addf %19, %20 : vector<8x128xf32>
    %cst_7 = arith.constant 0.000000e+00 : f32
    %22 = vector.broadcast %cst_7 : f32 to vector<8x128xf32>
    %23 = arith.maximumf %21, %22 : vector<8x128xf32>
    %c24_8 = arith.constant 24 : index
    %c128 = arith.constant 128 : index
    %24 = vector.load %arg1[%c24_8, %c128] : memref<153x384xf32, #tpu.memory_space<vmem>>, vector<128x128xf32>
    %cst_9 = arith.constant dense<0.000000e+00> : vector<8x128xf32>
    %25 = tpu.matmul %23, %24, %cst_9 {dimension_numbers = #tpu.dot_dimension_numbers<[1], [0], [0], [1], [0, 0, 1, 1], [], []>} : vector<8x128xf32>, vector<128x128xf32>, vector<8x128xf32> -> vector<8x128xf32>
    %26 = vector.extract_strided_slice %14 {offsets = [0, 256], sizes = [8, 128], strides = [1, 1]} : vector<8x384xf32> to vector<8x128xf32>
    %27 = arith.addf %25, %26 : vector<8x128xf32>
    %cst_10 = arith.constant 0.000000e+00 : f32
    %28 = vector.broadcast %cst_10 : f32 to vector<8x128xf32>
    %29 = arith.maximumf %27, %28 : vector<8x128xf32>
    %c24_11 = arith.constant 24 : index
    %c256 = arith.constant 256 : index
    %30 = vector.load %arg1[%c24_11, %c256] : memref<153x384xf32, #tpu.memory_space<vmem>>, vector<128x2xf32>
    %cst_12 = arith.constant dense<0.000000e+00> : vector<8x2xf32>
    %31 = tpu.matmul %29, %30, %cst_12 {dimension_numbers = #tpu.dot_dimension_numbers<[1], [0], [0], [1], [0, 0, 1, 1], [], []>} : vector<8x128xf32>, vector<128x2xf32>, vector<8x2xf32> -> vector<8x2xf32>
    %c152 = arith.constant 152 : index
    %c256_13 = arith.constant 256 : index
    %32 = vector.load %arg1[%c152, %c256_13] : memref<153x384xf32, #tpu.memory_space<vmem>>, vector<1x2xf32>
    %33 = vector.broadcast %32 : vector<1x2xf32> to vector<8x2xf32>
    %34 = arith.addf %31, %33 : vector<8x2xf32>
    %c0_14 = arith.constant 0 : index
    %c0_15 = arith.constant 0 : index
    %35 = vector.load %arg2[%c0_14, %c0_15] : memref<8x2xf32, #tpu.memory_space<vmem>>, vector<8x2xf32>
    tpu.vector_store %arg2[%c0_14, %c0_15], %34 {strides = array<i32>} : memref<8x2xf32, #tpu.memory_space<vmem>>, vector<8x2xf32>,
    return
  }
}

</mosaic_0001>

<llo_original>
// kernel: tpu_custom_call.1
$region0: #{tpu_custom_call.1}
  #allocation0 [shape = 'u32[]', space=smem, size = 0x4, offset = 0x4, fixed_abs, tag = 'smem constant byte address 0x4 - core index']
  #allocation1 [shape = 'u32[72,128]{1,0:T(1,128)}', space=vmem, size = 0x9000, scoped, tag = 'internal scratch']
  %s0 = inlined_call_operand.hbm [shape: f32[8,8], index: 0, kind: input, shape index: {}]
  %s1 = inlined_call_operand.hbm [shape: f32[153,384], index: 1, kind: input, shape index: {}]
  %s2 = inlined_call_operand.vmem [shape: f32[8,2], index: 2, kind: output, shape index: {}]
  %s3 = sld [smem:[#allocation0]]
  $region26: #{tpu_custom_call.1} parent=0
    _
  %s5 = ssub.s32 1, %s3
  %s6 = scalar_select 0, %s5, %s3
  $region1: #{tpu_custom_call.1} parent=0
    #allocation2 [shape = 'u8[4096]{0}', space=vmem, size = 0x1000, scoped, tag = 'input window, operand 0, single buffered']
    #allocation3 [shape = 's32[1]{0}', space=sflag, size = 0x4, scoped, tag = 'scoped memory for tpu_custom_call.1']
    #allocation4 [shape = 'u8[245760]{0}', space=vmem, size = 0x3c000, scoped, tag = 'input window, operand 1, single buffered']
    #allocation5 [shape = 's32[1]{0}', space=sflag, size = 0x4, scoped, tag = 'scoped memory for tpu_custom_call.1']
    %7 = vsyncpa [#allocation3], 0
    %8 = vsyncpa [#allocation5], 0
    // Predicated region
    $region2: #{tpu_custom_call.1} parent=1 // pred_check
      _
    $region3: #{tpu_custom_call.1} parent=1 // pred_check_branch
      %10 = sbr.rel (0) target = $region5
    $region4: #{tpu_custom_call.1} parent=1 // pred_region
      %12 = vsyncadd [#allocation3], 0
      %s14 = sshll.u32 %s0, 4
      %s15 = int_to_ptr.hbm [resolvable:$true] %s14
      %s16 = sshll.u32 [#allocation2], 4
      %s17 = int_to_ptr.vmem [resolvable:$true] %s16
      %19 = dma.hbm_to_vmem [thread:$0]  %s15, 128, %s17, [#allocation3]
    $region5: #{tpu_custom_call.1} parent=1 // pred_fallthru
      _
    // Predicated region
    $region6: #{tpu_custom_call.1} parent=1 // pred_check
      _
    $region7: #{tpu_custom_call.1} parent=1 // pred_check_branch
      %21 = sbr.rel (0) target = $region9
    $region8: #{tpu_custom_call.1} parent=1 // pred_region
      %23 = vsyncadd [#allocation5], 0
      %s24 = sshll.u32 %s1, 4
      %s25 = int_to_ptr.hbm [resolvable:$true] %s24
      %s26 = sshll.u32 [#allocation4], 4
      %s27 = int_to_ptr.vmem [resolvable:$true] %s26
      %32 = dma.hbm_to_vmem [thread:$0]  %s25, 7680, %s27, [#allocation5], 384, 384, 24
    $region9: #{tpu_custom_call.1} parent=1 // pred_fallthru
      _
    // Predicated region
    $region10: #{tpu_custom_call.1} parent=1 // pred_check
      _
    $region11: #{tpu_custom_call.1} parent=1 // pred_check_branch
      %34 = sbr.rel (0) target = $region13
    $region12: #{tpu_custom_call.1} parent=1 // pred_region
      %36 = dma.done [#allocation3], 128
    $region13: #{tpu_custom_call.1} parent=1 // pred_fallthru
      _
    // Predicated region
    $region14: #{tpu_custom_call.1} parent=1 // pred_check
      _
    $region15: #{tpu_custom_call.1} parent=1 // pred_check_branch
      %38 = sbr.rel (0) target = $region17
    $region16: #{tpu_custom_call.1} parent=1 // pred_region
      %40 = dma.done [#allocation5], 7680
    $region17: #{tpu_custom_call.1} parent=1 // pred_fallthru
      _
    %v41 = vld [vmem:[#allocation2] sm:$0xff]
    %v42 = vcvt.f32.s32.to.zero.pseudo %v41
    %vm43 = vcmp.gt.s32.totalorder %v42, 0
    %v44 = vsel %vm43, %v42, 0
    %vm45 = vcmp.lt.s32.totalorder %v44, 15
    %v46 = vsel %vm45, %v44, 15
    %v47 = vlaneseq
    %v48 = vand.u32 %v47, 127
    %49 = vset.pattern.permute.xlu0 2
    %50 = vperm.xlu0 %49, %v46
    %v51 = vpop.permute.xlu0 %50
    %vm52 = vcmp.eq.s32.totalorder %v48, %v51
    %v53 = vsel %vm52, 1, 0
    %v54 = vcvt.s32.f32 %v53
    %56 = vrot.lane.b32.xlu0 %v41, 16
    %v57 = vpop.permute.xlu0 %56
    %vm59 = vcmask 130048
    %v60 = vsel %vm59, %v54, %v57
    %v61 = vld [vmem:[#allocation4] sm:$0xff]
    %v62 = vld [vmem:[#allocation4 + $0x8] sm:$0xff]
    %v63 = vld [vmem:[#allocation4 + $0x10] sm:$0xff]
    %v64 = vld [vmem:[#allocation4 + $0x18] sm:$0xff]
    %v65 = vld [vmem:[#allocation4 + $0x20] sm:$0xff]
    %v66 = vld [vmem:[#allocation4 + $0x28] sm:$0xff]
    %v67 = vld [vmem:[#allocation4 + $0x30] sm:$0xff]
    %v68 = vld [vmem:[#allocation4 + $0x38] sm:$0xff]
    %v69 = vld [vmem:[#allocation4 + $0x40] sm:$0xff]
    %vm70 = vcmask 195584
    %v72 = vsel %vm70, %v60, 0
    %74 = vmatpush.msra.mxu0 0.0
    %75 = vmatpush.msra.mxu0 0.0
    %76 = vmatpush.msra.mxu0 0.0
    %77 = vmatpush.msra.mxu0 0.0
    %78 = vmatpush.msra.mxu0 0.0
    %79 = vmatpush.msra.mxu0 0.0
    %80 = vmatpush.msra.mxu0 0.0
    %81 = vmatpush.msra.mxu0 0.0
    %82 = vmatpush.msra.mxu0 0.0
    %83 = vmatpush.msra.mxu0 0.0
    %84 = vmatpush.msra.mxu0 0.0
    %85 = vmatpush.msra.mxu0 0.0
    %86 = vmatpush.msra.mxu0 0.0
    %87 = vmatpush.msra.mxu0 %v67
    %88 = vmatpush.msra.mxu0 %v64
    %89 = vmatpush.msra.mxu0 %v61
    %90 = vmatmul.f32.gmra.mxu0 %v72
    %v91 = vpop.f32.mrf.mxu0
    %v92 = vadd.f32 0.0, %v91
    %93 = vdwg.mxu0
    %94 = vmatpush.msra.mxu0 0.0
    %95 = vmatpush.msra.mxu0 0.0
    %96 = vmatpush.msra.mxu0 0.0
    %97 = vmatpush.msra.mxu0 0.0
    %98 = vmatpush.msra.mxu0 0.0
    %99 = vmatpush.msra.mxu0 0.0
    %100 = vmatpush.msra.mxu0 0.0
    %101 = vmatpush.msra.mxu0 0.0
    %102 = vmatpush.msra.mxu0 0.0
    %103 = vmatpush.msra.mxu0 0.0
    %104 = vmatpush.msra.mxu0 0.0
    %105 = vmatpush.msra.mxu0 0.0
    %106 = vmatpush.msra.mxu0 0.0
    %107 = vmatpush.msra.mxu0 %v68
    %108 = vmatpush.msra.mxu0 %v65
    %109 = vmatpush.msra.mxu0 %v62
    %110 = vmatmul.f32.gmra.mxu0 %v72
    %v111 = vpop.f32.mrf.mxu0
    %v112 = vadd.f32 0.0, %v111
    %113 = vdwg.mxu0
    %114 = vmatpush.msra.mxu0 0.0
    %115 = vmatpush.msra.mxu0 0.0
    %116 = vmatpush.msra.mxu0 0.0
    %117 = vmatpush.msra.mxu0 0.0
    %118 = vmatpush.msra.mxu0 0.0
    %119 = vmatpush.msra.mxu0 0.0
    %120 = vmatpush.msra.mxu0 0.0
    %121 = vmatpush.msra.mxu0 0.0
    %122 = vmatpush.msra.mxu0 0.0
    %123 = vmatpush.msra.mxu0 0.0
    %124 = vmatpush.msra.mxu0 0.0
    %125 = vmatpush.msra.mxu0 0.0
    %126 = vmatpush.msra.mxu0 0.0
    %127 = vmatpush.msra.mxu0 %v69
    %128 = vmatpush.msra.mxu0 %v66
    %129 = vmatpush.msra.mxu0 %v63
    %130 = vmatmul.f32.gmra.mxu0 %v72
    %v131 = vpop.f32.mrf.mxu0
    %v132 = vadd.f32 0.0, %v131
    %133 = vdwg.mxu0
    %v134 = vmax.f32 %v92, 0.0
    %v135 = vld [vmem:[#allocation4 + $0x48] sm:$0xff]
    %v136 = vld [vmem:[#allocation4 + $0x60] sm:$0xff]
    %v137 = vld [vmem:[#allocation4 + $0x78] sm:$0xff]
    %v138 = vld [vmem:[#allocation4 + $0x90] sm:$0xff]
    %v139 = vld [vmem:[#allocation4 + $0xa8] sm:$0xff]
    %v140 = vld [vmem:[#allocation4 + $0xc0] sm:$0xff]
    %v141 = vld [vmem:[#allocation4 + $0xd8] sm:$0xff]
    %v142 = vld [vmem:[#allocation4 + $0xf0] sm:$0xff]
    %v143 = vld [vmem:[#allocation4 + $0x108] sm:$0xff]
    %v144 = vld [vmem:[#allocation4 + $0x120] sm:$0xff]
    %v145 = vld [vmem:[#allocation4 + $0x138] sm:$0xff]
    %v146 = vld [vmem:[#allocation4 + $0x150] sm:$0xff]
    %v147 = vld [vmem:[#allocation4 + $0x168] sm:$0xff]
    %v148 = vld [vmem:[#allocation4 + $0x180] sm:$0xff]
    %v149 = vld [vmem:[#allocation4 + $0x198] sm:$0xff]
    %v150 = vld [vmem:[#allocation4 + $0x1b0] sm:$0xff]
    %151 = vmatpush.msra.mxu0 %v150
    %152 = vmatpush.msra.mxu0 %v149
    %153 = vmatpush.msra.mxu0 %v148
    %154 = vmatpush.msra.mxu0 %v147
    %155 = vmatpush.msra.mxu0 %v146
    %156 = vmatpush.msra.mxu0 %v145
    %157 = vmatpush.msra.mxu0 %v144
    %158 = vmatpush.msra.mxu0 %v143
    %159 = vmatpush.msra.mxu0 %v142
    %160 = vmatpush.msra.mxu0 %v141
    %161 = vmatpush.msra.mxu0 %v140
    %162 = vmatpush.msra.mxu0 %v139
    %163 = vmatpush.msra.mxu0 %v138
    %164 = vmatpush.msra.mxu0 %v137
    %165 = vmatpush.msra.mxu0 %v136
    %166 = vmatpush.msra.mxu0 %v135
    %167 = vmatmul.f32.gmra.mxu0 %v134
    %v168 = vpop.f32.mrf.mxu0
    %v169 = vadd.f32 %v112, %v168
    %170 = vdwg.mxu0
    %v171 = vmax.f32 %v169, 0.0
    %v172 = vld [vmem:[#allocation4 + $0x50] sm:$0xff]
    %v173 = vld [vmem:[#allocation4 + $0x68] sm:$0xff]
    %v174 = vld [vmem:[#allocation4 + $0x80] sm:$0xff]
    %v175 = vld [vmem:[#allocation4 + $0x98] sm:$0xff]
    %v176 = vld [vmem:[#allocation4 + $0xb0] sm:$0xff]
    %v177 = vld [vmem:[#allocation4 + $0xc8] sm:$0xff]
    %v178 = vld [vmem:[#allocation4 + $0xe0] sm:$0xff]
    %v179 = vld [vmem:[#allocation4 + $0xf8] sm:$0xff]
    %v180 = vld [vmem:[#allocation4 + $0x110] sm:$0xff]
    %v181 = vld [vmem:[#allocation4 + $0x128] sm:$0xff]
    %v182 = vld [vmem:[#allocation4 + $0x140] sm:$0xff]
    %v183 = vld [vmem:[#allocation4 + $0x158] sm:$0xff]
    %v184 = vld [vmem:[#allocation4 + $0x170] sm:$0xff]
    %v185 = vld [vmem:[#allocation4 + $0x188] sm:$0xff]
    %v186 = vld [vmem:[#allocation4 + $0x1a0] sm:$0xff]
    %v187 = vld [vmem:[#allocation4 + $0x1b8] sm:$0xff]
    %188 = vmatpush.msra.mxu0 %v187
    %189 = vmatpush.msra.mxu0 %v186
    %190 = vmatpush.msra.mxu0 %v185
    %191 = vmatpush.msra.mxu0 %v184
    %192 = vmatpush.msra.mxu0 %v183
    %193 = vmatpush.msra.mxu0 %v182
    %194 = vmatpush.msra.mxu0 %v181
    %195 = vmatpush.msra.mxu0 %v180
    %196 = vmatpush.msra.mxu0 %v179
    %197 = vmatpush.msra.mxu0 %v178
    %198 = vmatpush.msra.mxu0 %v177
    %199 = vmatpush.msra.mxu0 %v176
    %200 = vmatpush.msra.mxu0 %v175
    %201 = vmatpush.msra.mxu0 %v174
    %202 = vmatpush.msra.mxu0 %v173
    %203 = vmatpush.msra.mxu0 %v172
    %204 = vmatmul.f32.gmra.mxu0 %v171
    %v205 = vpop.f32.mrf.mxu0
    %v206 = vadd.f32 %v132, %v205
    %207 = vdwg.mxu0
    %v208 = vmax.f32 %v206, 0.0
    %v209 = vld [vmem:[#allocation4 + $0x58] sm:$0xff]
    %v210 = vld [vmem:[#allocation4 + $0x70] sm:$0xff]
    %v211 = vld [vmem:[#allocation4 + $0x88] sm:$0xff]
    %v212 = vld [vmem:[#allocation4 + $0xa0] sm:$0xff]
    %v213 = vld [vmem:[#allocation4 + $0xb8] sm:$0xff]
    %v214 = vld [vmem:[#allocation4 + $0xd0] sm:$0xff]
    %v215 = vld [vmem:[#allocation4 + $0xe8] sm:$0xff]
    %v216 = vld [vmem:[#allocation4 + $0x100] sm:$0xff]
    %v217 = vld [vmem:[#allocation4 + $0x118] sm:$0xff]
    %v218 = vld [vmem:[#allocation4 + $0x130] sm:$0xff]
    %v219 = vld [vmem:[#allocation4 + $0x148] sm:$0xff]
    %v220 = vld [vmem:[#allocation4 + $0x160] sm:$0xff]
    %v221 = vld [vmem:[#allocation4 + $0x178] sm:$0xff]
    %v222 = vld [vmem:[#allocation4 + $0x190] sm:$0xff]
    %v223 = vld [vmem:[#allocation4 + $0x1a8] sm:$0xff]
    %v224 = vld [vmem:[#allocation4 + $0x1c0] sm:$0xff]
    %v225 = vld [vmem:[#allocation4 + $0x1d8] ss:$0 sm:$0xff]
    %226 = vmatpush.msra.mxu0 %v224
    %227 = vmatpush.msra.mxu0 %v223
    %228 = vmatpush.msra.mxu0 %v222
    %229 = vmatpush.msra.mxu0 %v221
    %230 = vmatpush.msra.mxu0 %v220
    %231 = vmatpush.msra.mxu0 %v219
    %232 = vmatpush.msra.mxu0 %v218
    %233 = vmatpush.msra.mxu0 %v217
    %234 = vmatpush.msra.mxu0 %v216
    %235 = vmatpush.msra.mxu0 %v215
    %236 = vmatpush.msra.mxu0 %v214
    %237 = vmatpush.msra.mxu0 %v213
    %238 = vmatpush.msra.mxu0 %v212
    %239 = vmatpush.msra.mxu0 %v211
    %240 = vmatpush.msra.mxu0 %v210
    %241 = vmatpush.msra.mxu0 %v209
    %242 = vmatmul.f32.gmra.mxu0 %v208
    %v243 = vpop.f32.mrf.mxu0
    %v244 = vadd.f32 %v225, %v243
    %245 = vdwg.mxu0
    %vm246 = vcmask 15360
    %247 = vst.msk [vmem:[%s2] sm:$0xff] %vm246, %v244
    // Predicated region
    $region18: #{tpu_custom_call.1} parent=1 // pred_check
      _
    $region19: #{tpu_custom_call.1} parent=1 // pred_check_branch
      %249 = sbr.rel (0) target = $region21
    $region20: #{tpu_custom_call.1} parent=1 // pred_region
      _
    $region21: #{tpu_custom_call.1} parent=1 // pred_fallthru
      _
    // Predicated region
    $region22: #{tpu_custom_call.1} parent=1 // pred_check
      _
    $region23: #{tpu_custom_call.1} parent=1 // pred_check_branch
      %251 = sbr.rel (0) target = $region25
    $region24: #{tpu_custom_call.1} parent=1 // pred_region
      _
    $region25: #{tpu_custom_call.1} parent=1 // pred_fallthru
      _
    %252 = vsyncpa [#allocation3], 1
    %253 = vsyncpa [#allocation5], 1

</llo_original>
